<compile_context>
chip_gen: v5e
topology: v5e:2x2
jax: 0.10.0
libtpu: 0.0.40
codegen_flags: <defaults>
</compile_context>

<pallas_src>
import jax
import jax.numpy as jnp
from jax.experimental import pallas as pl
from jax.experimental.pallas import tpu as pltpu

IN_FEATURES = 5
OUT_FEATURES = 10
SMALL_N = 1024  # below this, the single-block path wins on fixed overhead


def _round_up(x, m):
    return ((x + m - 1) // m) * m


# ---------------------------------------------------------------------------
# Small-N path: one block, no grid, feature dim on lanes.
# ---------------------------------------------------------------------------
def _small_kernel(x_ref, wt_ref, b_ref, o_ref):
    # x_ref: (N, IN)  wt_ref: (IN, OUT)  b_ref: (1, OUT)  o_ref: (N, OUT)
    x = x_ref[...]
    wt = wt_ref[...]
    y = b_ref[...]  # (1, OUT); broadcasts on first FMA
    for k in range(IN_FEATURES):  # static unroll, tiny fixed trip count
        y = y + x[:, k:k + 1] * wt[k:k + 1, :]
    o_ref[...] = jnp.minimum(jnp.maximum(y, 0.0), 10.0).astype(o_ref.dtype)


# ---------------------------------------------------------------------------
# Large-N path: batch on lanes, 1-D parallel grid, resident params.
# ---------------------------------------------------------------------------
def _lane_kernel(w_ref, b_ref, x_ref, o_ref):
    # w_ref: (OUT, IN) resident   b_ref: (OUT, 1) resident
    # x_ref: (IN, TN)  streamed   o_ref: (OUT, TN) lane-dense
    x = x_ref[...]
    w = w_ref[...]
    y = b_ref[...]  # (OUT, 1); broadcasts across lanes
    for k in range(IN_FEATURES):  # VPU broadcast-FMA formulation (no MXU)
        y = y + w[:, k:k + 1] * x[k:k + 1, :]
    o_ref[...] = jnp.minimum(jnp.maximum(y, 0.0), 10.0).astype(o_ref.dtype)


def linear_clamp(x, weight, bias, *, tn=32768):
    """x: (N, 5) f32; weight: (10, 5) f32 (PyTorch layout); bias: (10,) f32.

    Returns clamp(x @ weight.T + bias, 0, 10) of shape (N, 10).
    """
    n, in_f = x.shape
    assert in_f == IN_FEATURES

    if n <= SMALL_N:
        # Single-tile path: whole arrays into VMEM, no relayout, no grid.
        wt = weight.T                       # (5, 10) -- 50 elements, negligible
        b2 = bias.reshape(1, OUT_FEATURES)
        return pl.pallas_call(
            _small_kernel,
            out_shape=jax.ShapeDtypeStruct((n, OUT_FEATURES), x.dtype),
        )(x, wt, b2)

    # Lane-dense path for large batches.
    tn = _round_up(tn, 128)
    tn_eff = min(tn, _round_up(n, 128))
    grid = (pl.cdiv(n, tn_eff),)            # partial last block handled by Pallas

    x_t = x.T                               # (IN_FEATURES, N); no padding copy
    b2 = bias.reshape(OUT_FEATURES, 1)

    out_t = pl.pallas_call(
        _lane_kernel,
        out_shape=jax.ShapeDtypeStruct((OUT_FEATURES, n), x.dtype),
        grid=grid,
        in_specs=[
            # Parameters: constant block index -> resident in VMEM.
            pl.BlockSpec((OUT_FEATURES, IN_FEATURES), lambda i: (0, 0)),
            pl.BlockSpec((OUT_FEATURES, 1), lambda i: (0, 0)),
            # Streaming input tiles, batch on lanes.
            pl.BlockSpec((IN_FEATURES, tn_eff), lambda i: (0, i)),
        ],
        out_specs=pl.BlockSpec((OUT_FEATURES, tn_eff), lambda i: (0, i)),
        compiler_params=pltpu.CompilerParams(
            dimension_semantics=("parallel",),  # megacore sharding on v7x
        ),
    )(weight, b2, x_t)

    return out_t.T  # (N, OUT_FEATURES)


if __name__ == "__main__":
    key = jax.random.PRNGKey(0)
    kx, kw, kb, kx2 = jax.random.split(key, 4)

    # PyTorch Linear default init: U(-1/sqrt(in_features), 1/sqrt(in_features))
    bound = 1.0 / (IN_FEATURES ** 0.5)
    weight = jax.random.uniform(
        kw, (OUT_FEATURES, IN_FEATURES), jnp.float32, -bound, bound
    )
    bias = jax.random.uniform(kb, (OUT_FEATURES,), jnp.float32, -bound, bound)

    # Small batch consistent with Linear(5, 10): exercises the small-N path.
    x = jax.random.normal(kx, (8, IN_FEATURES), jnp.float32)
    out = jax.block_until_ready(linear_clamp(x, weight, bias))
    ref = jnp.clip(x @ weight.T + bias, 0.0, 10.0)
    assert out.shape == (8, OUT_FEATURES)
    assert jnp.allclose(out, ref, atol=1e-5), "mismatch vs reference (small)"

    # Larger batch: lane-dense path, single (partial) block at default tn.
    x_big = jax.random.normal(kx2, (4100, IN_FEATURES), jnp.float32)
    out_big = jax.block_until_ready(linear_clamp(x_big, weight, bias))
    ref_big = jnp.clip(x_big @ weight.T + bias, 0.0, 10.0)
    assert out_big.shape == (4100, OUT_FEATURES)
    assert jnp.allclose(out_big, ref_big, atol=1e-5), "mismatch vs reference (big)"

    # Force a multi-tile grid with a partial last block (4100 = 2*2048 + 4).
    out_tiled = jax.block_until_ready(linear_clamp(x_big, weight, bias, tn=2048))
    assert jnp.allclose(out_tiled, ref_big, atol=1e-5), "mismatch vs reference (tiled)"

    print("KERNEL_OK")
</pallas_src>

<mosaic_0001>
module attributes {stable_mosaic.version = 11 : i64} {
  func.func @_small_kernel(%arg0: memref<8x5xf32, #tpu.memory_space<vmem>>, %arg1: memref<5x10xf32, #tpu.memory_space<vmem>>, %arg2: memref<1x10xf32, #tpu.memory_space<vmem>>, %arg3: memref<8x10xf32, #tpu.memory_space<vmem>>) attributes {dimension_semantics = [], scalar_prefetch = 0 : i64, scratch_operands = 0 : i64, tpu.core_type = #tpu.core_type<tc>} {
    %c0 = arith.constant 0 : index
    %c0_0 = arith.constant 0 : index
    %0 = vector.load %arg0[%c0, %c0_0] : memref<8x5xf32, #tpu.memory_space<vmem>>, vector<8x5xf32>
    %c0_1 = arith.constant 0 : index
    %c0_2 = arith.constant 0 : index
    %1 = vector.load %arg1[%c0_1, %c0_2] : memref<5x10xf32, #tpu.memory_space<vmem>>, vector<5x10xf32>
    %c0_3 = arith.constant 0 : index
    %c0_4 = arith.constant 0 : index
    %2 = vector.load %arg2[%c0_3, %c0_4] : memref<1x10xf32, #tpu.memory_space<vmem>>, vector<1x10xf32>
    %3 = vector.extract_strided_slice %0 {offsets = [0, 0], sizes = [8, 1], strides = [1, 1]} : vector<8x5xf32> to vector<8x1xf32>
    %4 = vector.extract_strided_slice %1 {offsets = [0, 0], sizes = [1, 10], strides = [1, 1]} : vector<5x10xf32> to vector<1x10xf32>
    %5 = vector.broadcast %3 : vector<8x1xf32> to vector<8x10xf32>
    %6 = vector.broadcast %4 : vector<1x10xf32> to vector<8x10xf32>
    %7 = arith.mulf %5, %6 : vector<8x10xf32>
    %8 = vector.broadcast %2 : vector<1x10xf32> to vector<8x10xf32>
    %9 = arith.addf %8, %7 : vector<8x10xf32>
    %10 = vector.extract_strided_slice %0 {offsets = [0, 1], sizes = [8, 1], strides = [1, 1]} : vector<8x5xf32> to vector<8x1xf32>
    %11 = vector.extract_strided_slice %1 {offsets = [1, 0], sizes = [1, 10], strides = [1, 1]} : vector<5x10xf32> to vector<1x10xf32>
    %12 = vector.broadcast %10 : vector<8x1xf32> to vector<8x10xf32>
    %13 = vector.broadcast %11 : vector<1x10xf32> to vector<8x10xf32>
    %14 = arith.mulf %12, %13 : vector<8x10xf32>
    %15 = arith.addf %9, %14 : vector<8x10xf32>
    %16 = vector.extract_strided_slice %0 {offsets = [0, 2], sizes = [8, 1], strides = [1, 1]} : vector<8x5xf32> to vector<8x1xf32>
    %17 = vector.extract_strided_slice %1 {offsets = [2, 0], sizes = [1, 10], strides = [1, 1]} : vector<5x10xf32> to vector<1x10xf32>
    %18 = vector.broadcast %16 : vector<8x1xf32> to vector<8x10xf32>
    %19 = vector.broadcast %17 : vector<1x10xf32> to vector<8x10xf32>
    %20 = arith.mulf %18, %19 : vector<8x10xf32>
    %21 = arith.addf %15, %20 : vector<8x10xf32>
    %22 = vector.extract_strided_slice %0 {offsets = [0, 3], sizes = [8, 1], strides = [1, 1]} : vector<8x5xf32> to vector<8x1xf32>
    %23 = vector.extract_strided_slice %1 {offsets = [3, 0], sizes = [1, 10], strides = [1, 1]} : vector<5x10xf32> to vector<1x10xf32>
    %24 = vector.broadcast %22 : vector<8x1xf32> to vector<8x10xf32>
    %25 = vector.broadcast %23 : vector<1x10xf32> to vector<8x10xf32>
    %26 = arith.mulf %24, %25 : vector<8x10xf32>
    %27 = arith.addf %21, %26 : vector<8x10xf32>
    %28 = vector.extract_strided_slice %0 {offsets = [0, 4], sizes = [8, 1], strides = [1, 1]} : vector<8x5xf32> to vector<8x1xf32>
    %29 = vector.extract_strided_slice %1 {offsets = [4, 0], sizes = [1, 10], strides = [1, 1]} : vector<5x10xf32> to vector<1x10xf32>
    %30 = vector.broadcast %28 : vector<8x1xf32> to vector<8x10xf32>
    %31 = vector.broadcast %29 : vector<1x10xf32> to vector<8x10xf32>
    %32 = arith.mulf %30, %31 : vector<8x10xf32>
    %33 = arith.addf %27, %32 : vector<8x10xf32>
    %cst = arith.constant 0.000000e+00 : f32
    %34 = vector.broadcast %cst : f32 to vector<8x10xf32>
    %35 = arith.maximumf %33, %34 : vector<8x10xf32>
    %cst_5 = arith.constant 1.000000e+01 : f32
    %36 = vector.broadcast %cst_5 : f32 to vector<8x10xf32>
    %37 = arith.minimumf %35, %36 : vector<8x10xf32>
    %c0_6 = arith.constant 0 : index
    %c0_7 = arith.constant 0 : index
    %38 = vector.load %arg3[%c0_6, %c0_7] : memref<8x10xf32, #tpu.memory_space<vmem>>, vector<8x10xf32>
    tpu.vector_store %arg3[%c0_6, %c0_7], %37 {strides = array<i32>} : memref<8x10xf32, #tpu.memory_space<vmem>>, vector<8x10xf32>,
    return
  }
}

</mosaic_0001>

<llo_original>
// kernel: tpu_custom_call.1
$region0: #{tpu_custom_call.1}
  #allocation0 [shape = 'u32[]', space=smem, size = 0x4, offset = 0x4, fixed_abs, tag = 'smem constant byte address 0x4 - core index']
  #allocation1 [shape = 'u32[72,128]{1,0:T(1,128)}', space=vmem, size = 0x9000, scoped, tag = 'internal scratch']
  %s0 = inlined_call_operand.hbm [shape: f32[8,5], index: 0, kind: input, shape index: {}]
  %s1 = inlined_call_operand.hbm [shape: f32[5,10], index: 1, kind: input, shape index: {}]
  %s2 = inlined_call_operand.vmem [shape: f32[1,10], index: 2, kind: input, shape index: {}]
  %s3 = inlined_call_operand.hbm [shape: f32[8,10], index: 3, kind: output, shape index: {}]
  %s4 = sld [smem:[#allocation0]]
  $region30: #{tpu_custom_call.1} parent=0
    _
  %s6 = ssub.s32 1, %s4
  %s7 = scalar_select 0, %s6, %s4
  $region1: #{tpu_custom_call.1} parent=0
    #allocation2 [shape = 'u8[4096]{0}', space=vmem, size = 0x1000, scoped, tag = 'input window, operand 0, single buffered']
    #allocation3 [shape = 's32[1]{0}', space=sflag, size = 0x4, scoped, tag = 'scoped memory for tpu_custom_call.1']
    #allocation4 [shape = 's32[1]{0}', space=sflag, size = 0x4, scoped, tag = 'scoped memory for tpu_custom_call.1']
    #allocation5 [shape = 'u8[4096]{0}', space=vmem, size = 0x1000, scoped, tag = 'input window, operand 1, single buffered']
    #allocation6 [shape = 's32[1]{0}', space=sflag, size = 0x4, scoped, tag = 'scoped memory for tpu_custom_call.1']
    #allocation7 [shape = 'u8[4096]{0}', space=vmem, size = 0x1000, scoped, tag = 'output window, operand 0, single buffered']
    %8 = vsyncpa [#allocation3], 0
    %9 = vsyncpa [#allocation6], 0
    %10 = vsyncpa [#allocation4], 0
    // Predicated region
    $region2: #{tpu_custom_call.1} parent=1 // pred_check
      _
    $region3: #{tpu_custom_call.1} parent=1 // pred_check_branch
      %12 = sbr.rel (0) target = $region5
    $region4: #{tpu_custom_call.1} parent=1 // pred_region
      %14 = vsyncadd [#allocation3], 0
      %s16 = sshll.u32 %s0, 4
      %s17 = int_to_ptr.hbm [resolvable:$true] %s16
      %s18 = sshll.u32 [#allocation2], 4
      %s19 = int_to_ptr.vmem [resolvable:$true] %s18
      %21 = dma.hbm_to_vmem [thread:$0]  %s17, 128, %s19, [#allocation3]
    $region5: #{tpu_custom_call.1} parent=1 // pred_fallthru
      _
    // Predicated region
    $region6: #{tpu_custom_call.1} parent=1 // pred_check
      _
    $region7: #{tpu_custom_call.1} parent=1 // pred_check_branch
      %23 = sbr.rel (0) target = $region9
    $region8: #{tpu_custom_call.1} parent=1 // pred_region
      %25 = vsyncadd [#allocation6], 0
      %s27 = sshll.u32 %s1, 4
      %s28 = int_to_ptr.hbm [resolvable:$true] %s27
      %s29 = sshll.u32 [#allocation5], 4
      %s30 = int_to_ptr.vmem [resolvable:$true] %s29
      %32 = dma.hbm_to_vmem [thread:$0]  %s28, 128, %s30, [#allocation6]
    $region9: #{tpu_custom_call.1} parent=1 // pred_fallthru
      _
    // Predicated region
    $region10: #{tpu_custom_call.1} parent=1 // pred_check
      _
    $region11: #{tpu_custom_call.1} parent=1 // pred_check_branch
      %34 = sbr.rel (0) target = $region13
    $region12: #{tpu_custom_call.1} parent=1 // pred_region
      _
    $region13: #{tpu_custom_call.1} parent=1 // pred_fallthru
      _
    // Predicated region
    $region14: #{tpu_custom_call.1} parent=1 // pred_check
      _
    $region15: #{tpu_custom_call.1} parent=1 // pred_check_branch
      %36 = sbr.rel (0) target = $region17
    $region16: #{tpu_custom_call.1} parent=1 // pred_region
      %38 = dma.done [#allocation3], 128
    $region17: #{tpu_custom_call.1} parent=1 // pred_fallthru
      _
    // Predicated region
    $region18: #{tpu_custom_call.1} parent=1 // pred_check
      _
    $region19: #{tpu_custom_call.1} parent=1 // pred_check_branch
      %40 = sbr.rel (0) target = $region21
    $region20: #{tpu_custom_call.1} parent=1 // pred_region
      %42 = dma.done [#allocation6], 128
    $region21: #{tpu_custom_call.1} parent=1 // pred_fallthru
      _
    %v43 = vld [vmem:[#allocation2] sm:$0xff]
    %v44 = vld [vmem:[#allocation5] sm:$0x1f]
    %v45 = vld [vmem:[%s2] sm:$0x1]
    %47 = vset.pattern.permute.xlu0 0
    %48 = vperm.xlu0 %47, %v43
    %v49 = vpop.permute.xlu0 %48
    %v51 = vperm.slane %v44, 0
    %v52 = vmul.f32 %v49, %v51
    %v54 = vperm.slane %v45, 0
    %v56 = vadd.f32 %v54, %v52
    %57 = vset.pattern.permute.xlu0 1
    %58 = vperm.xlu0 %57, %v43
    %v59 = vpop.permute.xlu0 %58
    %v61 = vperm.slane %v44, 1
    %v62 = vmul.f32 %v59, %v61
    %v63 = vadd.f32 %v56, %v62
    %64 = vset.pattern.permute.xlu0 2
    %65 = vperm.xlu0 %64, %v43
    %v66 = vpop.permute.xlu0 %65
    %v68 = vperm.slane %v44, 2
    %v69 = vmul.f32 %v66, %v68
    %v70 = vadd.f32 %v63, %v69
    %71 = vset.pattern.permute.xlu0 3
    %72 = vperm.xlu0 %71, %v43
    %v73 = vpop.permute.xlu0 %72
    %v75 = vperm.slane %v44, 3
    %v76 = vmul.f32 %v73, %v75
    %v77 = vadd.f32 %v70, %v76
    %78 = vset.pattern.permute.xlu0 4
    %79 = vperm.xlu0 %78, %v43
    %v80 = vpop.permute.xlu0 %79
    %v82 = vperm.slane %v44, 4
    %v83 = vmul.f32 %v80, %v82
    %v84 = vadd.f32 %v77, %v83
    %v85 = vmax.f32 %v84, 0.0
    %v86 = vmin.f32 %v85, 10.0
    %vm87 = vcmask 80896
    %88 = vst.msk [vmem:[#allocation7] sm:$0xff] %vm87, %v86
    // Predicated region
    $region22: #{tpu_custom_call.1} parent=1 // pred_check
      _
    $region23: #{tpu_custom_call.1} parent=1 // pred_check_branch
      %90 = sbr.rel (0) target = $region25
    $region24: #{tpu_custom_call.1} parent=1 // pred_region
      %92 = vsyncadd [#allocation4], 0
      %s94 = sshll.u32 [#allocation7], 4
      %s95 = int_to_ptr.vmem [resolvable:$true] %s94
      %s96 = sshll.u32 %s3, 4
      %s97 = int_to_ptr.hbm [resolvable:$true] %s96
      %99 = dma.vmem_to_hbm [thread:$0]  %s95, 128, %s97, [#allocation4]
    $region25: #{tpu_custom_call.1} parent=1 // pred_fallthru
      _
    // Predicated region
    $region26: #{tpu_custom_call.1} parent=1 // pred_check
      _
    $region27: #{tpu_custom_call.1} parent=1 // pred_check_branch
      %101 = sbr.rel (0) target = $region29
    $region28: #{tpu_custom_call.1} parent=1 // pred_region
      %103 = dma.done [#allocation4], 128
    $region29: #{tpu_custom_call.1} parent=1 // pred_fallthru
      _
    %104 = vsyncpa [#allocation3], 1
    %105 = vsyncpa [#allocation6], 1
    %106 = vsyncpa [#allocation4], 1

</llo_original>
